<compile_context>
chip_gen: v7x
topology: tpu7x:2x2x1
jax: 0.10.0
libtpu: 0.0.40
codegen_flags: <defaults>
</compile_context>

<pallas_src>
import functools

import jax
import jax.numpy as jnp
import numpy as np
from jax.experimental import pallas as pl
from jax.experimental.pallas import tpu as pltpu


def _round_up(x, m):
    return -(-int(x) // m) * m


def _vmem_cap_bytes():
    """Physical VMEM per TensorCore (fallback: v7x's 64 MiB, the smallest)."""
    try:
        info = pltpu.get_tpu_info()
        for name in ("vmem_capacity_bytes", "vmem_bytes", "vmem_size_bytes"):
            cap = getattr(info, name, None)
            if cap:
                return int(cap)
    except Exception:
        pass
    return 64 << 20


def _auto_questions_per_tile(b, c, per_q_bytes):
    """Pick tb so the kh tile is ~2-8 MiB/buffer and the grid has >=4 steps."""
    divs = [d for d in range(1, b + 1) if b % d == 0]
    # Hard constraint: tb*c rows must be sublane-aligned (or cover the batch).
    cands = [d for d in divs if (d * c) % 8 == 0 or d == b] or [b]
    target, lo, hi = 4 << 20, 2 << 20, 8 << 20

    def score(d):
        tile = d * per_q_bytes
        nb = b // d
        return (
            tile > hi,                # never exceed ~8 MiB per buffer
            b >= 4 and nb < 4,        # want >= 4 pipelined grid steps
            tile < lo,                # prefer >= 2 MiB tiles
            abs(tile - target),       # as close to ~4 MiB as possible
        )

    return min(cands, key=score)


def _auto_q_chunk(q, rows, h, kh_itemsize, budget_bytes=2 << 20):
    """Largest divisor of q whose f32-upcast chunk (rows, qc, h) fits budget."""
    h_pad = _round_up(h, 128)
    pack = 8 * max(1, 4 // max(1, int(kh_itemsize)))   # 8 f32 / 16 bf16 sublanes

    def chunk_bytes(qc):
        return rows * _round_up(qc, 8) * h_pad * 4

    if chunk_bytes(q) <= budget_bytes:
        return q
    fits = [d for d in range(1, q) if q % d == 0 and chunk_bytes(d) <= budget_bytes]
    if not fits:
        return 1
    aligned = [d for d in fits if d % pack == 0]
    return max(aligned) if aligned else max(fits)


# ----------------------------------------------------------------------------
# Kernel 1: streaming scoring head (mean-pool + linear heads) per question tile
# ----------------------------------------------------------------------------
def _score_kernel(combine, q, q_chunk, *refs):
    if combine == 'logits':
        kh_ref, qlog_ref, w_ref, b_ref, sim_ref = refs
    elif combine == 'only-knowledge':
        kh_ref, w_ref, b_ref, sim_ref = refs
    elif combine == 'features':
        kh_ref, feat_ref, w_ref, b_ref, sim_ref = refs
    else:
        raise ValueError(f"unknown combine mode: {combine}")

    rows, _, h = kh_ref.shape                      # rows = tb * num_choices
    nchunks = q // q_chunk

    # knowledge_features = last_hidden_state[:, :num_query, :].mean(1)
    # q-chunked f32 accumulation bounds the upcast temporary to one chunk.
    if nchunks == 1:
        kf = jnp.sum(kh_ref[...].astype(jnp.float32), axis=1)
    else:
        def body(j, acc):
            qs = pl.multiple_of(j * q_chunk, q_chunk)
            chunk = kh_ref[:, pl.ds(qs, q_chunk), :].astype(jnp.float32)
            return acc + jnp.sum(chunk, axis=1)
        kf = jax.lax.fori_loop(0, nchunks, body,
                               jnp.zeros((rows, h), jnp.float32),
                               unroll=nchunks <= 8)
    kf = kf * (1.0 / q)                            # (rows, h) f32

    if combine == 'features':
        # merged_feature_head([f, kf, f-kf, f*kf]) with folded weights:
        #   rows of w = [w_f + w_{f-kf}, w_kf - w_{f-kf}, w_{f*kf}]
        f = feat_ref[...].astype(jnp.float32)      # (rows, h)
        w = w_ref[...]                             # (3, h)
        mix = f * w[0:1, :] + kf * w[1:2, :] + (f * kf) * w[2:3, :]
        sim = jnp.sum(mix, axis=-1, keepdims=True) + b_ref[0]
    else:
        # ikm_head(knowledge_features)
        sim = jnp.sum(kf * w_ref[...], axis=-1, keepdims=True) + b_ref[0]
        if combine == 'logits':
            sim = sim + qlog_ref[...]              # ITM "match" logit per row

    sim_ref[...] = sim                             # (rows, 1) f32


# ----------------------------------------------------------------------------
# Kernel 2: tiny finalize — mean cross-entropy loss + argmax predictions
# ----------------------------------------------------------------------------
def _loss_kernel(labels_ref, sim_ref, loss_ref, preds_ref):
    sim = sim_ref[...]                                         # (b, c) f32
    m = jnp.max(sim, axis=-1, keepdims=True)
    lse = m + jnp.log(jnp.sum(jnp.exp(sim - m), axis=-1, keepdims=True))
    col = jax.lax.broadcasted_iota(jnp.int32, sim.shape, 1)
    onehot = col == labels_ref[...]                            # (b, c)
    tgt = jnp.sum(jnp.where(onehot, sim, 0.0), axis=-1, keepdims=True)
    loss_ref[...] = jnp.mean(lse - tgt, keepdims=True)         # (1, 1)
    # First-max index (matches jnp.argmax; torch tie-break is unspecified).
    is_max = sim == m
    preds_ref[...] = jnp.min(jnp.where(is_max, col, sim.shape[1]),
                             axis=-1, keepdims=True)           # (b, 1) int32


# ----------------------------------------------------------------------------
# Wrapper reproducing BLIP2GuidedVQA.forward on top of backbone outputs
# ----------------------------------------------------------------------------
def blip2_guided_vqa_forward(itm_logits, features, knowledge_hidden, labels,
                             params, *, num_choices, combine,
                             questions_per_tile=None, q_tokens_per_chunk=None):
    """Returns (loss, preds, labels) — mirrors the module's (loss, preds, labels, qid)."""
    if combine not in ('logits', 'only-knowledge', 'features'):
        raise ValueError(f"unknown combine mode: {combine}")

    n, q, h = knowledge_hidden.shape
    c = int(num_choices)
    assert n % c == 0, "rows must be batch * num_choices"
    b = n // c

    kh_item = knowledge_hidden.dtype.itemsize
    q_pad = _round_up(q, 8)
    h_pad = _round_up(h, 128)

    # ---- tile selection (questions per grid step) ----
    per_q_bytes = c * q_pad * h_pad * kh_item
    if combine == 'features':
        per_q_bytes += c * h_pad * features.dtype.itemsize
    if questions_per_tile is None:
        tb = _auto_questions_per_tile(b, c, per_q_bytes)
    else:
        tb = int(questions_per_tile)
        assert b % tb == 0, "questions_per_tile must divide the number of questions"
        assert (tb * c) % 8 == 0 or tb == b, (
            "questions_per_tile * num_choices must be a multiple of 8 unless "
            "it covers the whole batch (sublane-aligned blocks)")
    nb = b // tb
    tr = tb * c                                    # rows per grid step

    # ---- q-chunking of the f32 upcast accumulation ----
    if q_tokens_per_chunk is None:
        q_chunk = _auto_q_chunk(q, tr, h, kh_item)
    else:
        q_chunk = int(q_tokens_per_chunk)
        assert 1 <= q_chunk <= q and q % q_chunk == 0, (
            "q_tokens_per_chunk must divide the number of query tokens")

    # ---- inputs / BlockSpecs (only what this combine mode needs is DMA'd) ----
    inputs = [knowledge_hidden]                    # (N, Q, H), streamed
    in_specs = [pl.BlockSpec((tr, q, h), lambda i: (i, 0, 0))]

    if combine == 'logits':
        # Pre-slice the ITM "match" logit column; tile it with the grid.
        qlog = itm_logits[:, 1].reshape(n, 1).astype(jnp.float32)
        inputs.append(qlog)
        in_specs.append(pl.BlockSpec((tr, 1), lambda i: (i, 0)))

    if combine == 'features':
        inputs.append(features)                    # (N, H), sublane-dense 2-D
        in_specs.append(pl.BlockSpec((tr, h), lambda i: (i, 0)))
        wm = params['w_merged']    # (4, H): [w_f, w_kf, w_{f-kf}, w_{f*kf}]
        w_fold = jnp.stack([wm[0] + wm[2], wm[1] - wm[2], wm[3]], axis=0)
        inputs.append(w_fold.astype(jnp.float32))
        in_specs.append(pl.BlockSpec((3, h), lambda i: (0, 0)))
        inputs.append(params['b_merged'].reshape(1).astype(jnp.float32))
        in_specs.append(pl.BlockSpec(memory_space=pltpu.MemorySpace.SMEM))
    else:
        inputs.append(params['w_ikm'].astype(jnp.float32))
        in_specs.append(pl.BlockSpec((1, h), lambda i: (0, 0)))
        inputs.append(params['b_ikm'].reshape(1).astype(jnp.float32))
        in_specs.append(pl.BlockSpec(memory_space=pltpu.MemorySpace.SMEM))

    # ---- VMEM budget (per-TC), capped per generation ----
    kh_tile = tr * q_pad * h_pad * kh_item
    need = 2 * kh_tile                                   # double-buffered kh stream
    need += tr * _round_up(q_chunk, 8) * h_pad * 4       # f32 upcast chunk
    need += 3 * _round_up(tr, 8) * h_pad * 4             # kf accumulator + temps
    if combine == 'features':
        need += 2 * _round_up(tr, 8) * h_pad * features.dtype.itemsize
        need += 2 * _round_up(tr, 8) * h_pad * 4         # f32(f), f*kf
    if combine == 'logits':
        need += 2 * _round_up(tr, 8) * 128 * 4           # qlog tiles
    need += 2 * _round_up(tr, 8) * 128 * 4               # sim output blocks
    need += 8 * h_pad * 4                                # weights
    cap = int(0.75 * _vmem_cap_bytes())                  # ~48 MiB on v7x, 96 MiB v5e/v6e
    vmem_limit = int(min(cap, max(32 << 20, int(1.25 * need))))

    # ---- advisory cost estimate (this call is HBM-bound, ~0.25 flop/byte) ----
    kh_bytes = n * q * h * kh_item
    io_bytes = kh_bytes + n * 4 + (h + 1) * 4
    flops = n * q * h + 4 * n * h + 2 * n
    if combine == 'features':
        io_bytes += n * h * features.dtype.itemsize + (3 * h + 1) * 4
        flops += 6 * n * h
    if combine == 'logits':
        io_bytes += n * 4
    cost = pl.CostEstimate(flops=int(flops), transcendentals=0,
                           bytes_accessed=int(io_bytes))

    kern = functools.partial(_score_kernel, combine, q, q_chunk)
    sim_rows = pl.pallas_call(
        kern,
        out_shape=jax.ShapeDtypeStruct((n, 1), jnp.float32),
        grid=(nb,),
        in_specs=in_specs,
        out_specs=pl.BlockSpec((tr, 1), lambda i: (i, 0)),
        compiler_params=pltpu.CompilerParams(
            # Each grid step writes its own output block -> fully parallel
            # (v7x: both TensorCores).  Pipeline depth stays at the default 2;
            # only raise via pipeline_mode=pl.Buffered(3) if an xprof trace on
            # v5e shows exposed DMA at the chosen tile size.
            dimension_semantics=("parallel",),
            vmem_limit_bytes=vmem_limit),
        cost_estimate=cost,
    )(*inputs)

    # ---- tiny CE-loss / argmax finalize on the (B, C) logits ----
    sim = sim_rows.reshape(b, c)                         # B*C*4 bytes — negligible
    labels2 = labels.reshape(b, 1).astype(jnp.int32)
    loss, preds = pl.pallas_call(
        _loss_kernel,
        out_shape=(jax.ShapeDtypeStruct((1, 1), jnp.float32),
                   jax.ShapeDtypeStruct((b, 1), jnp.int32)),
        grid=(1,),
        in_specs=[pl.BlockSpec((b, 1), lambda i: (0, 0)),
                  pl.BlockSpec((b, c), lambda i: (0, 0))],
        out_specs=(pl.BlockSpec((1, 1), lambda i: (0, 0)),
                   pl.BlockSpec((b, 1), lambda i: (0, 0))),
        compiler_params=pltpu.CompilerParams(dimension_semantics=("arbitrary",)),
        cost_estimate=pl.CostEstimate(flops=12 * b * c,
                                      transcendentals=b * (c + 1),
                                      bytes_accessed=(b * c + 3 * b + 1) * 4),
    )(labels2, sim)

    return loss[0, 0], preds[:, 0], labels


# ----------------------------------------------------------------------------
# Pure-JAX reference (mirrors the PyTorch module) for the built-in self-test
# ----------------------------------------------------------------------------
def reference_forward(itm_logits, features, knowledge_hidden, labels, params,
                      *, num_choices, combine):
    f = features.astype(jnp.float32)
    kf = jnp.mean(knowledge_hidden.astype(jnp.float32), axis=1)
    k_logit = kf @ params['w_ikm'][0] + params['b_ikm'][0]
    if combine == 'logits':
        sim = itm_logits[:, 1] + k_logit
    elif combine == 'only-knowledge':
        sim = k_logit
    else:
        w = params['w_merged']
        sim = (f @ w[0] + kf @ w[1] + (f - kf) @ w[2] + (f * kf) @ w[3]
               + params['b_merged'][0])
    sim = sim.reshape(-1, num_choices)
    logp = jax.nn.log_softmax(sim, axis=-1)
    loss = -jnp.mean(jnp.take_along_axis(logp, labels[:, None].astype(jnp.int32),
                                         axis=-1))
    preds = jnp.argmax(sim, axis=-1)
    return loss, preds


def init_params(key, hidden):
    # nn.Linear-style init: U(-1/sqrt(fan_in), 1/sqrt(fan_in))
    k1, k2, k3, k4 = jax.random.split(key, 4)
    s1 = 1.0 / float(hidden) ** 0.5
    s2 = 1.0 / float(4 * hidden) ** 0.5
    return {
        'w_ikm': jax.random.uniform(k1, (1, hidden), jnp.float32, -s1, s1),
        'b_ikm': jax.random.uniform(k2, (1,), jnp.float32, -s1, s1),
        # merged_feature_head weight (1, 4H) stored as (4, H) chunks
        # [w_f, w_kf, w_{f-kf}, w_{f*kf}]
        'w_merged': jax.random.uniform(k3, (4, hidden), jnp.float32, -s2, s2),
        'b_merged': jax.random.uniform(k4, (1,), jnp.float32, -s2, s2),
    }


if __name__ == "__main__":
    key = jax.random.PRNGKey(0)

    configs = [
        # B questions, C choices, H hidden, Q query tokens
        dict(B=2, C=4, H=32, Q=8,  tile=None, qchunk=None, dtype=jnp.float32),
        dict(B=8, C=4, H=32, Q=8,  tile=None, qchunk=None, dtype=jnp.float32),   # auto tb -> 4 steps
        dict(B=8, C=4, H=32, Q=16, tile=4,    qchunk=8,    dtype=jnp.float32),   # chunked-q path, f32
        dict(B=8, C=4, H=32, Q=32, tile=2,    qchunk=16,   dtype=jnp.bfloat16),  # chunked-q path, bf16
    ]

    for cfg in configs:
        B, C, H, Q = cfg['B'], cfg['C'], cfg['H'], cfg['Q']
        N = B * C
        key, kp, k1, k2, k3, k4 = jax.random.split(key, 6)
        params = init_params(kp, H)

        # Synthetic backbone outputs (stand-ins for BLIP2 ITM / Q-Former outputs).
        itm_logits = jax.random.normal(k1, (N, 2), jnp.float32)
        features = jax.random.normal(k2, (N, H), jnp.float32).astype(cfg['dtype'])
        knowledge_hidden = jax.random.normal(k3, (N, Q, H),
                                             jnp.float32).astype(cfg['dtype'])
        labels = jax.random.randint(k4, (B,), 0, C, jnp.int32)

        for combine in ('logits', 'only-knowledge', 'features'):
            loss, preds, labs = blip2_guided_vqa_forward(
                itm_logits, features, knowledge_hidden, labels, params,
                num_choices=C, combine=combine,
                questions_per_tile=cfg['tile'], q_tokens_per_chunk=cfg['qchunk'])
            loss = jax.block_until_ready(loss)
            preds = jax.block_until_ready(preds)

            ref_loss, ref_preds = reference_forward(
                itm_logits, features, knowledge_hidden, labels, params,
                num_choices=C, combine=combine)
            np.testing.assert_allclose(np.asarray(loss), np.asarray(ref_loss),
                                       rtol=1e-3, atol=1e-3)
            assert np.array_equal(np.asarray(preds), np.asarray(ref_preds)), (
                combine, np.asarray(preds), np.asarray(ref_preds))

    print("KERNEL_OK")
</pallas_src>

<mosaic_0001>
module attributes {stable_mosaic.version = 11 : i64} {
  func.func @_score_kernel(%arg0: i32, %arg1: memref<8x8x32xf32, #tpu.memory_space<vmem>>, %arg2: memref<8x1xf32, #tpu.memory_space<vmem>>, %arg3: memref<1x32xf32, #tpu.memory_space<vmem>>, %arg4: memref<1xf32, #tpu.memory_space<smem>>, %arg5: memref<8x1xf32, #tpu.memory_space<vmem>>) attributes {dimension_semantics = [#tpu.dimension_semantics<parallel>], iteration_bounds = array<i64: 1>, scalar_prefetch = 0 : i64, scratch_operands = 0 : i64, tpu.core_type = #tpu.core_type<tc>, window_params = [{transform_indices = @transform_0, window_bounds = array<i64: 8, 8, 32>}, {transform_indices = @transform_1, window_bounds = array<i64: 8, 1>}, {pipeline_mode = #tpu.pipeline_mode<synchronous>, transform_indices = @transform_2, window_bounds = array<i64: 1, 32>}, {transform_indices = @transform_3, window_bounds = array<i64: 1>}, {transform_indices = @transform_4, window_bounds = array<i64: 8, 1>}]} {
    %c0 = arith.constant 0 : index
    %c0_0 = arith.constant 0 : index
    %c0_1 = arith.constant 0 : index
    %0 = vector.load %arg1[%c0, %c0_0, %c0_1] : memref<8x8x32xf32, #tpu.memory_space<vmem>>, vector<8x8x32xf32>
    %cst = arith.constant dense<0.000000e+00> : vector<8x32xf32>
    %1 = vector.multi_reduction <add>, %0, %cst [1] : vector<8x8x32xf32> to vector<8x32xf32>
    %cst_2 = arith.constant 1.250000e-01 : f32
    %2 = vector.broadcast %cst_2 : f32 to vector<8x32xf32>
    %3 = arith.mulf %1, %2 : vector<8x32xf32>
    %c0_3 = arith.constant 0 : index
    %c0_4 = arith.constant 0 : index
    %4 = vector.load %arg3[%c0_3, %c0_4] : memref<1x32xf32, #tpu.memory_space<vmem>>, vector<1x32xf32>
    %5 = vector.broadcast %4 : vector<1x32xf32> to vector<8x32xf32>
    %6 = arith.mulf %3, %5 : vector<8x32xf32>
    %cst_5 = arith.constant dense<0.000000e+00> : vector<8xf32>
    %7 = vector.multi_reduction <add>, %6, %cst_5 [1] : vector<8x32xf32> to vector<8xf32>
    %8 = vector.shape_cast %7 : vector<8xf32> to vector<8x1xf32>
    %c0_6 = arith.constant 0 : index
    %9 = memref.load %arg4[%c0_6] : memref<1xf32, #tpu.memory_space<smem>>
    %10 = vector.broadcast %9 : f32 to vector<8x1xf32>
    %11 = arith.addf %8, %10 : vector<8x1xf32>
    %c0_7 = arith.constant 0 : index
    %c0_8 = arith.constant 0 : index
    %12 = vector.load %arg2[%c0_7, %c0_8] : memref<8x1xf32, #tpu.memory_space<vmem>>, vector<8x1xf32>
    %13 = arith.addf %11, %12 : vector<8x1xf32>
    %c0_9 = arith.constant 0 : index
    %c0_10 = arith.constant 0 : index
    %14 = vector.load %arg5[%c0_9, %c0_10] : memref<8x1xf32, #tpu.memory_space<vmem>>, vector<8x1xf32>
    tpu.vector_store %arg5[%c0_9, %c0_10], %13 {strides = array<i32>} : memref<8x1xf32, #tpu.memory_space<vmem>>, vector<8x1xf32>,
    return
  }
  func.func @transform_0(%arg0: i32) -> (i32, i32, i32) {
    %c0_i32 = arith.constant 0 : i32
    %c0_i32_0 = arith.constant 0 : i32
    %c0_i32_1 = arith.constant 0 : i32
    return %arg0, %c0_i32, %c0_i32_0 : i32, i32, i32
  }
  func.func @transform_1(%arg0: i32) -> (i32, i32) {
    %c0_i32 = arith.constant 0 : i32
    %c0_i32_0 = arith.constant 0 : i32
    return %arg0, %c0_i32 : i32, i32
  }
  func.func @transform_2(%arg0: i32) -> (i32, i32) {
    %c0_i32 = arith.constant 0 : i32
    %c0_i32_0 = arith.constant 0 : i32
    %c0_i32_1 = arith.constant 0 : i32
    return %c0_i32, %c0_i32_0 : i32, i32
  }
  func.func @transform_3(%arg0: i32) -> i32 {
    %c0_i32 = arith.constant 0 : i32
    %c0_i32_0 = arith.constant 0 : i32
    return %c0_i32 : i32
  }
  func.func @transform_4(%arg0: i32) -> (i32, i32) {
    %c0_i32 = arith.constant 0 : i32
    %c0_i32_0 = arith.constant 0 : i32
    return %arg0, %c0_i32 : i32, i32
  }
}

</mosaic_0001>

<llo_original>
// kernel: tpu_custom_call.1
$region0: #{tpu_custom_call.1}
  #allocation0 [shape = 'u32[]', space=smem, size = 0x4, offset = 0x4, fixed_abs, tag = 'smem constant byte address 0x4 - core index']
  #allocation1 [shape = 'u32[144,128]{1,0:T(1,128)}', space=vmem, size = 0x12000, scoped, tag = 'internal scratch']
  #allocation2 [shape = 'f32[1]{0:T(128)S(6)}', space=smem, size = 0x200, scoped, tag = 'scoped memory for tpu_custom_call.1']
  %s0 = inlined_call_operand.hbm [shape: f32[8,8,32], index: 0, kind: input, shape index: {}]
  %s1 = inlined_call_operand.vmem [shape: f32[8,1], index: 1, kind: input, shape index: {}]
  %s2 = inlined_call_operand.vmem [shape: f32[1,32], index: 2, kind: input, shape index: {}]
  %s3 = inlined_call_operand.<no memory space> [shape: f32[1], index: 3, kind: input, shape index: {}]
  %s4 = inlined_call_operand.vmem [shape: f32[8,1], index: 4, kind: output, shape index: {}]
  %s5 = sld [smem:[#allocation0]]
  $region30: #{tpu_custom_call.1} parent=0
    _
  %s7 = ssub.s32 1, %s5
  %s8 = scalar_select 0, %s7, %s5
  %9 = sst [smem:[#allocation2]] %s3
  $region1: #{tpu_custom_call.1} parent=0
    #allocation3 [shape = 'u8[32768]{0}', space=vmem, size = 0x8000, scoped, tag = 'input window, operand 0, single buffered']
    #allocation4 [shape = 's32[1]{0}', space=sflag, size = 0x4, scoped, tag = 'scoped memory for tpu_custom_call.1']
    %10 = vsyncpa [#allocation4], 0
    // Predicated region
    $region2: #{tpu_custom_call.1} parent=1 // pred_check
      _
    $region3: #{tpu_custom_call.1} parent=1 // pred_check_branch
      %12 = sbr.rel (0) target = $region5
    $region4: #{tpu_custom_call.1} parent=1 // pred_region
      %s14 = ssub.s32 1024, 1024
      %15 = vsyncadd [#allocation4], %s14
      %s16 = sshll.u32 [#allocation3], 4
      %s17 = int_to_ptr.vmem [resolvable:$true] %s16
      %22 = dma.hbm_to_vmem [thread:$0]  %s0, 1024, %s17, [#allocation4], 128, 128, 8
    $region5: #{tpu_custom_call.1} parent=1 // pred_fallthru
      _
    // Predicated region
    $region6: #{tpu_custom_call.1} parent=1 // pred_check
      _
    $region7: #{tpu_custom_call.1} parent=1 // pred_check_branch
      %24 = sbr.rel (0) target = $region9
    $region8: #{tpu_custom_call.1} parent=1 // pred_region
      _
    $region9: #{tpu_custom_call.1} parent=1 // pred_fallthru
      _
    // Predicated region
    $region10: #{tpu_custom_call.1} parent=1 // pred_check
      _
    $region11: #{tpu_custom_call.1} parent=1 // pred_check_branch
      %26 = sbr.rel (0) target = $region13
    $region12: #{tpu_custom_call.1} parent=1 // pred_region
      _
    $region13: #{tpu_custom_call.1} parent=1 // pred_fallthru
      _
    // Predicated region
    $region14: #{tpu_custom_call.1} parent=1 // pred_check
      _
    $region15: #{tpu_custom_call.1} parent=1 // pred_check_branch
      %28 = sbr.rel (0) target = $region17
    $region16: #{tpu_custom_call.1} parent=1 // pred_region
      _
    $region17: #{tpu_custom_call.1} parent=1 // pred_fallthru
      _
    // Predicated region
    $region18: #{tpu_custom_call.1} parent=1 // pred_check
      _
    $region19: #{tpu_custom_call.1} parent=1 // pred_check_branch
      %30 = sbr.rel (0) target = $region21
    $region20: #{tpu_custom_call.1} parent=1 // pred_region
      %31 = dma.done [#allocation4], 1024
    $region21: #{tpu_custom_call.1} parent=1 // pred_fallthru
      _
    %v32 = vld [vmem:[#allocation3] sm:$0xff]
    %v33 = vld [vmem:[#allocation3 + $0x8] sm:$0xff]
    %v34 = vld [vmem:[#allocation3 + $0x10] sm:$0xff]
    %v35 = vld [vmem:[#allocation3 + $0x18] sm:$0xff]
    %v36 = vld [vmem:[#allocation3 + $0x20] sm:$0xff]
    %v37 = vld [vmem:[#allocation3 + $0x28] sm:$0xff]
    %v38 = vld [vmem:[#allocation3 + $0x30] sm:$0xff]
    %v39 = vld [vmem:[#allocation3 + $0x38] sm:$0xff]
    %vm40 = vcmask 261120
    %v41 = vsel %vm40, %v32, 0.0
    %v42 = vrot.slane %v41, 4
    %v43 = vadd.f32 %v41, %v42
    %v44 = vrot.slane %v43, 2
    %v45 = vadd.f32 %v43, %v44
    %v46 = vrot.slane %v45, 1
    %v47 = vadd.f32 %v45, %v46
    %v48 = vsel %vm40, %v33, 0.0
    %v49 = vrot.slane %v48, 4
    %v50 = vadd.f32 %v48, %v49
    %v51 = vrot.slane %v50, 2
    %v52 = vadd.f32 %v50, %v51
    %v53 = vrot.slane %v52, 1
    %v54 = vadd.f32 %v52, %v53
    %v55 = vsel %vm40, %v34, 0.0
    %v56 = vrot.slane %v55, 4
    %v57 = vadd.f32 %v55, %v56
    %v58 = vrot.slane %v57, 2
    %v59 = vadd.f32 %v57, %v58
    %v60 = vrot.slane %v59, 1
    %v61 = vadd.f32 %v59, %v60
    %v62 = vsel %vm40, %v35, 0.0
    %v63 = vrot.slane %v62, 4
    %v64 = vadd.f32 %v62, %v63
    %v65 = vrot.slane %v64, 2
    %v66 = vadd.f32 %v64, %v65
    %v67 = vrot.slane %v66, 1
    %v68 = vadd.f32 %v66, %v67
    %v69 = vsel %vm40, %v36, 0.0
    %v70 = vrot.slane %v69, 4
    %v71 = vadd.f32 %v69, %v70
    %v72 = vrot.slane %v71, 2
    %v73 = vadd.f32 %v71, %v72
    %v74 = vrot.slane %v73, 1
    %v75 = vadd.f32 %v73, %v74
    %v76 = vsel %vm40, %v37, 0.0
    %v77 = vrot.slane %v76, 4
    %v78 = vadd.f32 %v76, %v77
    %v79 = vrot.slane %v78, 2
    %v80 = vadd.f32 %v78, %v79
    %v81 = vrot.slane %v80, 1
    %v82 = vadd.f32 %v80, %v81
    %v83 = vsel %vm40, %v38, 0.0
    %v84 = vrot.slane %v83, 4
    %v85 = vadd.f32 %v83, %v84
    %v86 = vrot.slane %v85, 2
    %v87 = vadd.f32 %v85, %v86
    %v88 = vrot.slane %v87, 1
    %v89 = vadd.f32 %v87, %v88
    %v90 = vsel %vm40, %v39, 0.0
    %v91 = vrot.slane %v90, 4
    %v92 = vadd.f32 %v90, %v91
    %v93 = vrot.slane %v92, 2
    %v94 = vadd.f32 %v92, %v93
    %v95 = vrot.slane %v94, 1
    %v96 = vadd.f32 %v94, %v95
    %v97 = vmul.f32 %v47, 0.125
    %v98 = vmul.f32 %v54, 0.125
    %v99 = vmul.f32 %v61, 0.125
    %v100 = vmul.f32 %v68, 0.125
    %v101 = vmul.f32 %v75, 0.125
    %v102 = vmul.f32 %v82, 0.125
    %v103 = vmul.f32 %v89, 0.125
    %v104 = vmul.f32 %v96, 0.125
    %v105 = vld [vmem:[%s2] sm:$0x1]
    %v107 = vlaneseq
    %v108 = vshrl.u32 %v107, 7
    %v109 = vsub.s32 0, %v108
    %v110 = vrot.slane %v105, %v109
    %v112 = vmul.f32 %v97, %v110
    %v113 = vmul.f32 %v98, %v110
    %v114 = vmul.f32 %v99, %v110
    %v115 = vmul.f32 %v100, %v110
    %v116 = vmul.f32 %v101, %v110
    %v117 = vmul.f32 %v102, %v110
    %v118 = vmul.f32 %v103, %v110
    %v119 = vmul.f32 %v104, %v110
    %v128 = vrot.slane %v113, 7
    %vm129 = vcmask 1041409
    %v130 = vsel %vm129, %v128, %v112
    %v131 = vrot.slane %v114, 6
    %vm132 = vcmask 1042434
    %v133 = vsel %vm132, %v131, %v130
    %v134 = vrot.slane %v115, 5
    %vm135 = vcmask 1043459
    %v136 = vsel %vm135, %v134, %v133
    %v137 = vrot.slane %v116, 4
    %vm138 = vcmask 1044484
    %v139 = vsel %vm138, %v137, %v136
    %v140 = vrot.slane %v117, 3
    %vm141 = vcmask 1045509
    %v142 = vsel %vm141, %v140, %v139
    %v143 = vrot.slane %v118, 2
    %vm144 = vcmask 1046534
    %v145 = vsel %vm144, %v143, %v142
    %v146 = vrot.slane %v119, 1
    %vm147 = vcmask 1047559
    %v148 = vsel %vm147, %v146, %v145
    %v150 = vsel %vm40, %v148, 0.0
    %151 = vadd.xlane.f32.xlu0 %v150
    %v152 = vpop.xlane.xlu0 %151
    %s153 = sld [smem:[#allocation2]]
    %v154 = vstv %s153
    %v155 = vadd.f32 %v152, %v154
    %v156 = vld [vmem:[%s1] sm:$0xff]
    %v157 = vadd.f32 %v155, %v156
    %vm158 = vcmask 7168
    %159 = vst.msk [vmem:[%s4] sm:$0xff] %vm158, %v157
    // Predicated region
    $region22: #{tpu_custom_call.1} parent=1 // pred_check
      _
    $region23: #{tpu_custom_call.1} parent=1 // pred_check_branch
      %161 = sbr.rel (0) target = $region25
    $region24: #{tpu_custom_call.1} parent=1 // pred_region
      _
    $region25: #{tpu_custom_call.1} parent=1 // pred_fallthru
      _
    // Predicated region
    $region26: #{tpu_custom_call.1} parent=1 // pred_check
      _
    $region27: #{tpu_custom_call.1} parent=1 // pred_check_branch
      %163 = sbr.rel (0) target = $region29
    $region28: #{tpu_custom_call.1} parent=1 // pred_region
      _
    $region29: #{tpu_custom_call.1} parent=1 // pred_fallthru
      _
    %164 = vsyncpa [#allocation4], 1

</llo_original>
